<compile_context>
chip_gen: v6e
topology: v6e:2x2x1
jax: 0.10.0
libtpu: 0.0.40
codegen_flags: <defaults>
</compile_context>

<pallas_src>
import jax
import jax.numpy as jnp
from jax.experimental import pallas as pl
from jax.experimental.pallas import tpu as pltpu

IN_FEATURES = 4
OUT_FEATURES = 5


def _model_kernel(x_smem, wb_ref, o_ref):
    # x_smem: (1, 4) f32 in SMEM (four scalars).
    # wb_ref: (8, 128) f32 in VMEM; rows 0..3 = W.T rows (lanes 0..4),
    #         row 4 = bias + 3 (lanes 0..4), everything else 0.
    acc = wb_ref[4:5, :]                                   # (1, 128) seeded with bias + 3
    for k in range(IN_FEATURES):                           # unrolled scalar x vector FMAs (VPU)
        acc = acc + x_smem[0, k] * wb_ref[k:k + 1, :]
    v4 = acc[:, 0:OUT_FEATURES]                            # (1, 5) valid lanes
    # v4 / ((v4 < 6) * 6): true divide, divisor is 6 where v4 < 6 else 0 (-> +inf, v4 > 0 there).
    o_ref[...] = (v4 / jnp.where(v4 < 6.0, 6.0, 0.0)).astype(o_ref.dtype)


def model_forward(x, wb_slab):
    """x: (1, 4) f32.  wb_slab: (8, 128) f32 packed once at parameter-prep time."""
    assert x.shape == (1, IN_FEATURES)
    assert wb_slab.shape == (8, 128)
    return pl.pallas_call(
        _model_kernel,
        out_shape=jax.ShapeDtypeStruct((1, OUT_FEATURES), jnp.float32),
        in_specs=[
            pl.BlockSpec(memory_space=pltpu.MemorySpace.SMEM),   # x: scalars
            pl.BlockSpec(memory_space=pltpu.MemorySpace.VMEM),   # packed W.T + (bias+3)
        ],
        out_specs=pl.BlockSpec(memory_space=pltpu.MemorySpace.VMEM),
    )(x, wb_slab)


def pack_params(weight, bias):
    """Pack transposed weight (rows 0..3) and bias+3 (row 4) into one (8,128) vreg tile."""
    wb = jnp.zeros((8, 128), jnp.float32)
    wb = wb.at[0:IN_FEATURES, 0:OUT_FEATURES].set(weight.T)
    wb = wb.at[IN_FEATURES, 0:OUT_FEATURES].set(bias + 3.0)
    return wb


if __name__ == "__main__":
    key = jax.random.PRNGKey(0)
    k_x, k_w, k_b = jax.random.split(key, 3)

    batch = 1

    # Deterministic parameter init (PyTorch Linear-style uniform bounds).
    bound = 1.0 / (IN_FEATURES ** 0.5)
    weight = jax.random.uniform(k_w, (OUT_FEATURES, IN_FEATURES),
                                minval=-bound, maxval=bound, dtype=jnp.float32)
    bias = jax.random.uniform(k_b, (OUT_FEATURES,),
                              minval=-bound, maxval=bound, dtype=jnp.float32)

    x = jax.random.normal(k_x, (batch, IN_FEATURES), dtype=jnp.float32)

    # Parameter prep (done once, not per call).
    wb_slab = pack_params(weight, bias)

    out = model_forward(x, wb_slab)
    jax.block_until_ready(out)

    # Reference in plain JAX with the original (un-fused) semantics.
    v4 = x @ weight.T + bias[None, :] + 3.0
    ref = v4 / ((v4 < 6.0).astype(jnp.float32) * 6.0)

    assert out.shape == (batch, OUT_FEATURES)
    assert jnp.allclose(out, ref, rtol=1e-6, atol=1e-6, equal_nan=True)

    print("KERNEL_OK")
</pallas_src>

<mosaic_0001>
module attributes {stable_mosaic.version = 11 : i64} {
  func.func @_model_kernel(%arg0: memref<1x4xf32, #tpu.memory_space<smem>>, %arg1: memref<8x128xf32, #tpu.memory_space<vmem>>, %arg2: memref<1x5xf32, #tpu.memory_space<vmem>>) attributes {dimension_semantics = [], scalar_prefetch = 0 : i64, scratch_operands = 0 : i64, tpu.core_type = #tpu.core_type<tc>} {
    %c4 = arith.constant 4 : index
    %c0 = arith.constant 0 : index
    %0 = vector.load %arg1[%c4, %c0] : memref<8x128xf32, #tpu.memory_space<vmem>>, vector<1x128xf32>
    %c0_0 = arith.constant 0 : index
    %c0_1 = arith.constant 0 : index
    %1 = memref.load %arg0[%c0_0, %c0_1] : memref<1x4xf32, #tpu.memory_space<smem>>
    %c0_2 = arith.constant 0 : index
    %c0_3 = arith.constant 0 : index
    %2 = vector.load %arg1[%c0_2, %c0_3] : memref<8x128xf32, #tpu.memory_space<vmem>>, vector<1x128xf32>
    %3 = vector.broadcast %1 : f32 to vector<1x128xf32>
    %4 = arith.mulf %3, %2 : vector<1x128xf32>
    %5 = arith.addf %0, %4 : vector<1x128xf32>
    %c0_4 = arith.constant 0 : index
    %c1 = arith.constant 1 : index
    %6 = memref.load %arg0[%c0_4, %c1] : memref<1x4xf32, #tpu.memory_space<smem>>
    %c1_5 = arith.constant 1 : index
    %c0_6 = arith.constant 0 : index
    %7 = vector.load %arg1[%c1_5, %c0_6] : memref<8x128xf32, #tpu.memory_space<vmem>>, vector<1x128xf32>
    %8 = vector.broadcast %6 : f32 to vector<1x128xf32>
    %9 = arith.mulf %8, %7 : vector<1x128xf32>
    %10 = arith.addf %5, %9 : vector<1x128xf32>
    %c0_7 = arith.constant 0 : index
    %c2 = arith.constant 2 : index
    %11 = memref.load %arg0[%c0_7, %c2] : memref<1x4xf32, #tpu.memory_space<smem>>
    %c2_8 = arith.constant 2 : index
    %c0_9 = arith.constant 0 : index
    %12 = vector.load %arg1[%c2_8, %c0_9] : memref<8x128xf32, #tpu.memory_space<vmem>>, vector<1x128xf32>
    %13 = vector.broadcast %11 : f32 to vector<1x128xf32>
    %14 = arith.mulf %13, %12 : vector<1x128xf32>
    %15 = arith.addf %10, %14 : vector<1x128xf32>
    %c0_10 = arith.constant 0 : index
    %c3 = arith.constant 3 : index
    %16 = memref.load %arg0[%c0_10, %c3] : memref<1x4xf32, #tpu.memory_space<smem>>
    %c3_11 = arith.constant 3 : index
    %c0_12 = arith.constant 0 : index
    %17 = vector.load %arg1[%c3_11, %c0_12] : memref<8x128xf32, #tpu.memory_space<vmem>>, vector<1x128xf32>
    %18 = vector.broadcast %16 : f32 to vector<1x128xf32>
    %19 = arith.mulf %18, %17 : vector<1x128xf32>
    %20 = arith.addf %15, %19 : vector<1x128xf32>
    %21 = vector.extract_strided_slice %20 {offsets = [0, 0], sizes = [1, 5], strides = [1, 1]} : vector<1x128xf32> to vector<1x5xf32>
    %cst = arith.constant 6.000000e+00 : f32
    %22 = vector.broadcast %cst : f32 to vector<1x5xf32>
    %23 = arith.cmpf olt, %21, %22 : vector<1x5xf32>
    %cst_13 = arith.constant 6.000000e+00 : f32
    %cst_14 = arith.constant 0.000000e+00 : f32
    %24 = vector.broadcast %cst_13 : f32 to vector<1x5xf32>
    %25 = vector.broadcast %cst_14 : f32 to vector<1x5xf32>
    %26 = arith.select %23, %24, %25 : vector<1x5xi1>, vector<1x5xf32>
    %27 = arith.divf %21, %26 : vector<1x5xf32>
    %c0_15 = arith.constant 0 : index
    %c0_16 = arith.constant 0 : index
    %28 = vector.load %arg2[%c0_15, %c0_16] : memref<1x5xf32, #tpu.memory_space<vmem>>, vector<1x5xf32>
    tpu.vector_store %arg2[%c0_15, %c0_16], %27 {strides = array<i32>} : memref<1x5xf32, #tpu.memory_space<vmem>>, vector<1x5xf32>,
    return
  }
}

</mosaic_0001>

<llo_original>
// kernel: tpu_custom_call.1
$region0: #{tpu_custom_call.1}
  #allocation0 [shape = 'u32[]', space=smem, size = 0x4, offset = 0x4, fixed_abs, tag = 'smem constant byte address 0x4 - core index']
  #allocation1 [shape = 'u32[144,128]{1,0:T(1,128)}', space=vmem, size = 0x12000, scoped, tag = 'internal scratch']
  %s0 = inlined_call_operand.hbm [shape: f32[1,4], index: 0, kind: input, shape index: {}]
  %s1 = inlined_call_operand.hbm [shape: f32[8,128], index: 1, kind: input, shape index: {}]
  %s2 = inlined_call_operand.hbm [shape: f32[1,5], index: 2, kind: output, shape index: {}]
  %s3 = sld [smem:[#allocation0]]
  $region26: #{tpu_custom_call.1} parent=0
    _
  %s5 = ssub.s32 1, %s3
  %s6 = scalar_select 0, %s5, %s3
  $region1: #{tpu_custom_call.1} parent=0
    #allocation2 [shape = 'u8[512]{0}', space=smem, size = 0x200, scoped, tag = 'input window, operand 0, single buffered']
    #allocation3 [shape = 's32[1]{0}', space=sflag, size = 0x4, scoped, tag = 'scoped memory for tpu_custom_call.1']
    #allocation4 [shape = 's32[1]{0}', space=sflag, size = 0x4, scoped, tag = 'scoped memory for tpu_custom_call.1']
    #allocation5 [shape = 's32[1]{0}', space=sflag, size = 0x4, scoped, tag = 'scoped memory for tpu_custom_call.1']
    #allocation6 [shape = 'u8[4096]{0}', space=vmem, size = 0x1000, scoped, tag = 'input window, operand 1, single buffered']
    #allocation7 [shape = 'u8[512]{0}', space=vmem, size = 0x400, scoped, tag = 'output window, operand 0, single buffered']
    %7 = vsyncpa [#allocation5], 0
    %8 = vsyncpa [#allocation3], 0
    %9 = vsyncpa [#allocation4], 0
    // Predicated region
    $region2: #{tpu_custom_call.1} parent=1 // pred_check
      _
    $region3: #{tpu_custom_call.1} parent=1 // pred_check_branch
      %11 = sbr.rel (0) target = $region5
    $region4: #{tpu_custom_call.1} parent=1 // pred_region
      %s13 = ssub.s32 16, 16
      %14 = vsyncadd [#allocation5], %s13
      %17 = dma.hbm_to_smem %s0, 16, [#allocation2], [#allocation5]
    $region5: #{tpu_custom_call.1} parent=1 // pred_fallthru
      _
    // Predicated region
    $region6: #{tpu_custom_call.1} parent=1 // pred_check
      _
    $region7: #{tpu_custom_call.1} parent=1 // pred_check_branch
      %19 = sbr.rel (0) target = $region9
    $region8: #{tpu_custom_call.1} parent=1 // pred_region
      %s21 = ssub.s32 128, 128
      %22 = vsyncadd [#allocation3], %s21
      %s24 = sshll.u32 [#allocation6], 4
      %s25 = int_to_ptr.vmem [resolvable:$true] %s24
      %27 = dma.hbm_to_vmem [thread:$0]  %s1, 128, %s25, [#allocation3]
    $region9: #{tpu_custom_call.1} parent=1 // pred_fallthru
      _
    // Predicated region
    $region10: #{tpu_custom_call.1} parent=1 // pred_check
      _
    $region11: #{tpu_custom_call.1} parent=1 // pred_check_branch
      %29 = sbr.rel (0) target = $region13
    $region12: #{tpu_custom_call.1} parent=1 // pred_region
      %30 = dma.done [#allocation5], 16
    $region13: #{tpu_custom_call.1} parent=1 // pred_fallthru
      _
    // Predicated region
    $region14: #{tpu_custom_call.1} parent=1 // pred_check
      _
    $region15: #{tpu_custom_call.1} parent=1 // pred_check_branch
      %32 = sbr.rel (0) target = $region17
    $region16: #{tpu_custom_call.1} parent=1 // pred_region
      %33 = dma.done [#allocation3], 128
    $region17: #{tpu_custom_call.1} parent=1 // pred_fallthru
      _
    %34 = sfence
    %v35 = vld [vmem:[#allocation6 + $0x4] sm:$0x1]
    %s36 = sld [smem:[#allocation2]]
    %v37 = vld [vmem:[#allocation6] sm:$0x1]
    %v38 = vstv %s36
    %v39 = vmul.f32 %v38, %v37
    %v40 = vadd.f32 %v35, %v39
    %s41 = sld [smem:[#allocation2 + $0x1]]
    %v42 = vld [vmem:[#allocation6 + $0x1] sm:$0x1]
    %v43 = vstv %s41
    %v44 = vmul.f32 %v43, %v42
    %v45 = vadd.f32 %v40, %v44
    %s46 = sld [smem:[#allocation2 + $0x2]]
    %v47 = vld [vmem:[#allocation6 + $0x2] sm:$0x1]
    %v48 = vstv %s46
    %v49 = vmul.f32 %v48, %v47
    %v50 = vadd.f32 %v45, %v49
    %s51 = sld [smem:[#allocation2 + $0x3]]
    %v52 = vld [vmem:[#allocation6 + $0x3] sm:$0x1]
    %v53 = vstv %s51
    %v54 = vmul.f32 %v53, %v52
    %v55 = vadd.f32 %v50, %v54
    %vm56 = vcmp.lt.f32.partialorder %v55, 6.0
    %v57 = vsel %vm56, 6.0, 0.0
    %v58 = vrcp.pop %v57
    %v59 = vmul.f32 %v55, %v58
    %vm60 = vcmask 32768
    %61 = vst.msk [vmem:[#allocation7] sm:$0x1] %vm60, %v59
    // Predicated region
    $region18: #{tpu_custom_call.1} parent=1 // pred_check
      _
    $region19: #{tpu_custom_call.1} parent=1 // pred_check_branch
      %63 = sbr.rel (0) target = $region21
    $region20: #{tpu_custom_call.1} parent=1 // pred_region
      %s65 = ssub.s32 16, 16
      %66 = vsyncadd [#allocation4], %s65
      %s68 = sshll.u32 [#allocation7], 4
      %s69 = int_to_ptr.vmem [resolvable:$true] %s68
      %71 = dma.vmem_to_hbm [thread:$0]  %s69, 16, %s2, [#allocation4]
    $region21: #{tpu_custom_call.1} parent=1 // pred_fallthru
      _
    // Predicated region
    $region22: #{tpu_custom_call.1} parent=1 // pred_check
      _
    $region23: #{tpu_custom_call.1} parent=1 // pred_check_branch
      %73 = sbr.rel (0) target = $region25
    $region24: #{tpu_custom_call.1} parent=1 // pred_region
      %74 = dma.done [#allocation4], 16
    $region25: #{tpu_custom_call.1} parent=1 // pred_fallthru
      _
    %75 = vsyncpa [#allocation3], 1
    %76 = vsyncpa [#allocation4], 1
    %77 = vsyncpa [#allocation5], 1

</llo_original>
